<compile_context>
chip_gen: v5e
topology: v5e:2x2
jax: 0.10.0
libtpu: 0.0.40
codegen_flags: <defaults>
</compile_context>

<pallas_src>
import jax
import jax.numpy as jnp
from jax.experimental import pallas as pl
from jax.experimental.pallas import tpu as pltpu

BN_EPS = 1e-5


def dual_tirg2film_kernel(img_ref, text_ref, w_ref, b_ref, out_ref):
    """
    img_ref : (B, D)   f32
    text_ref: (B, D)   f32
    w_ref   : (D, 8D)  bf16 = [W1a | W2a | W1b | W2b | Wg_a(2D) | Wg_b(2D)]
    b_ref   : (1, 8D)  f32  = [b1a | b2a | b1b | b2b | bg_a(2D) | bg_b(2D)]
    out_ref : (B, D)   f32
    """
    D = img_ref.shape[1]

    x = img_ref[...]          # (B, D) f32
    t = text_ref[...]         # (B, D) f32

    def wslice(i, n=1):
        # Static, lane-aligned slice of the bf16 weight slab (i*D % 128 == 0).
        return w_ref[:, i * D:(i + n) * D]

    def bslice(i, n=1):
        return b_ref[:, i * D:(i + n) * D]

    def mm(a_f32, w_bf16):
        # MXU-native bf16 x bf16 matmul, f32 accumulation.
        return jnp.dot(a_f32.astype(jnp.bfloat16), w_bf16,
                       preferred_element_type=jnp.float32)

    # Fused FiLM-generator matmul for BOTH blocks: one (B,D) x (D,4D) MXU push.
    # gb layout: [gamma_a | beta_a | gamma_b | beta_b]
    gb = mm(t, wslice(4, 4)) + bslice(4, 4)            # (B, 4D) f32

    def film_res_block(x, w1, b1, w2, b2, gamma, beta):
        h = jnp.maximum(mm(x, w1) + b1, 0.0)           # conv1 (1x1) + ReLU
        h = mm(h, w2) + b2                             # conv2 (1x1)
        # BatchNorm2d, training-mode batch statistics, identity affine.
        mean = jnp.mean(h, axis=0, keepdims=True)
        var = jnp.mean((h - mean) * (h - mean), axis=0, keepdims=True)
        h = (h - mean) * jax.lax.rsqrt(var + BN_EPS)
        h = jnp.maximum(gamma * h + beta, 0.0)         # FiLM + ReLU
        return x + h                                   # residual

    x = film_res_block(x, wslice(0), bslice(0), wslice(1), bslice(1),
                       gb[:, 0 * D:1 * D], gb[:, 1 * D:2 * D])
    x = film_res_block(x, wslice(2), bslice(2), wslice(3), bslice(3),
                       gb[:, 2 * D:3 * D], gb[:, 3 * D:4 * D])

    out_ref[...] = x.astype(out_ref.dtype)


def init_params(key, dim):
    """Deterministic synthetic parameters for the two FilmResBlocks.

    Weights are stored as (D_in, D_out) so the kernel computes x @ W, which
    matches PyTorch's x @ W_torch.T with W = W_torch.T.
    """
    ks = jax.random.split(key, 12)
    scale = 1.0 / jnp.sqrt(jnp.float32(dim))

    def mk(k, shape):
        return jax.random.normal(k, shape, jnp.float32) * scale

    params = []
    for blk in range(2):
        o = blk * 6
        params += [
            mk(ks[o + 0], (dim, dim)),            # W1 (conv1, 1x1)
            mk(ks[o + 1], (1, dim)),              # b1
            mk(ks[o + 2], (dim, dim)),            # W2 (conv2, 1x1)
            mk(ks[o + 3], (1, dim)),              # b2
            mk(ks[o + 4], (dim, 2 * dim)),        # Wg (FiLM generator)
            mk(ks[o + 5], (1, 2 * dim)),          # bg
        ]
    return params


def pack_params(params):
    """Pack 12 parameter arrays into one bf16 weight slab + one f32 bias slab."""
    (w1a, b1a, w2a, b2a, wga, bga,
     w1b, b1b, w2b, b2b, wgb, bgb) = params
    w_slab = jnp.concatenate([w1a, w2a, w1b, w2b, wga, wgb],
                             axis=1).astype(jnp.bfloat16)      # (D, 8D) bf16
    b_slab = jnp.concatenate([b1a, b2a, b1b, b2b, bga, bgb],
                             axis=1).astype(jnp.float32)       # (1, 8D) f32
    return w_slab, b_slab


def dual_tirg2film(img, text, params, dim):
    # img may arrive as (B, D, 1, 1) NCHW or (B, D); module reshapes to (-1, D).
    img2d = img.reshape(-1, dim).astype(jnp.float32)
    text2d = text.reshape(-1, dim).astype(jnp.float32)
    B = img2d.shape[0]

    w_slab, b_slab = pack_params(params)

    # TODO(synk): for dim >~ 1024 or large production B, switch to a K-tiled /
    # batch-tiled grid (accumulator + two-pass BN) so resident weights fit the
    # default scoped VMEM and v7x's 64 MiB physical VMEM.

    vmem = pl.BlockSpec(memory_space=pltpu.MemorySpace.VMEM)

    flops = 2 * B * dim * (4 * dim) + 2 * B * dim * (4 * dim)   # 4 DxD mms + fused (D,4D) gen
    bytes_accessed = (w_slab.size * 2 + b_slab.size * 4
                      + img2d.size * 4 + text2d.size * 4 + B * dim * 4)

    out = pl.pallas_call(
        dual_tirg2film_kernel,
        out_shape=jax.ShapeDtypeStruct((B, dim), jnp.float32),
        in_specs=[vmem, vmem, vmem, vmem],
        out_specs=vmem,
        cost_estimate=pl.CostEstimate(flops=int(flops),
                                      transcendentals=int(2 * dim),
                                      bytes_accessed=int(bytes_accessed)),
    )(img2d, text2d, w_slab, b_slab)
    return out  # (B, D), matching the module's final .view(-1, dim)


def reference(img, text, params, dim):
    """Pure-JAX reference that mirrors the kernel math (bf16 matmuls, f32 acc)."""
    x = img.reshape(-1, dim).astype(jnp.float32)
    t = text.reshape(-1, dim).astype(jnp.float32)

    def mm(a, w):
        return jnp.dot(a.astype(jnp.bfloat16), w.astype(jnp.bfloat16),
                       preferred_element_type=jnp.float32)

    for blk in range(2):
        w1, b1, w2, b2, wg, bg = params[blk * 6: blk * 6 + 6]
        h = jnp.maximum(mm(x, w1) + b1, 0.0)
        h = mm(h, w2) + b2
        mean = jnp.mean(h, axis=0, keepdims=True)
        var = jnp.mean((h - mean) * (h - mean), axis=0, keepdims=True)
        h = (h - mean) * jax.lax.rsqrt(var + BN_EPS)
        gb = mm(t, wg) + bg
        gamma, beta = gb[:, :dim], gb[:, dim:]
        h = jnp.maximum(gamma * h + beta, 0.0)
        x = x + h
    return x


if __name__ == "__main__":
    DIM = 128   # lane-aligned stand-in for the default dim=512
    B = 8       # sublane-aligned small batch

    key = jax.random.PRNGKey(0)
    k_img, k_txt, k_par = jax.random.split(key, 3)

    img = jax.random.normal(k_img, (B, DIM, 1, 1), jnp.float32)   # NCHW, 1x1 spatial
    text = jax.random.normal(k_txt, (B, DIM), jnp.float32)
    params = init_params(k_par, DIM)

    out = dual_tirg2film(img, text, params, DIM)
    out = jax.block_until_ready(out)

    ref = reference(img, text, params, DIM)
    assert out.shape == (B, DIM)
    assert jnp.allclose(out, ref, atol=1e-3, rtol=1e-3), "mismatch vs JAX reference"

    print("KERNEL_OK")
</pallas_src>

<mosaic_0001>
module attributes {stable_mosaic.version = 11 : i64} {
  func.func @dual_tirg2film_kernel(%arg0: memref<8x128xf32, #tpu.memory_space<vmem>>, %arg1: memref<8x128xf32, #tpu.memory_space<vmem>>, %arg2: memref<128x1024xbf16, #tpu.memory_space<vmem>>, %arg3: memref<1x1024xf32, #tpu.memory_space<vmem>>, %arg4: memref<8x128xf32, #tpu.memory_space<vmem>>) attributes {dimension_semantics = [], scalar_prefetch = 0 : i64, scratch_operands = 0 : i64, tpu.core_type = #tpu.core_type<tc>} {
    %c0 = arith.constant 0 : index
    %c0_0 = arith.constant 0 : index
    %0 = vector.load %arg0[%c0, %c0_0] : memref<8x128xf32, #tpu.memory_space<vmem>>, vector<8x128xf32>
    %c0_1 = arith.constant 0 : index
    %c0_2 = arith.constant 0 : index
    %1 = vector.load %arg1[%c0_1, %c0_2] : memref<8x128xf32, #tpu.memory_space<vmem>>, vector<8x128xf32>
    %c0_3 = arith.constant 0 : index
    %c512 = arith.constant 512 : index
    %2 = vector.load %arg2[%c0_3, %c512] : memref<128x1024xbf16, #tpu.memory_space<vmem>>, vector<128x512xbf16>
    %3 = arith.truncf %1 : vector<8x128xf32> to vector<8x128xbf16>
    %cst = arith.constant dense<0.000000e+00> : vector<8x512xf32>
    %4 = tpu.matmul %3, %2, %cst {dimension_numbers = #tpu.dot_dimension_numbers<[1], [0], [0], [1], [0, 0, 1, 1], [], []>} : vector<8x128xbf16>, vector<128x512xbf16>, vector<8x512xf32> -> vector<8x512xf32>
    %c0_4 = arith.constant 0 : index
    %c512_5 = arith.constant 512 : index
    %5 = vector.load %arg3[%c0_4, %c512_5] : memref<1x1024xf32, #tpu.memory_space<vmem>>, vector<1x512xf32>
    %6 = vector.broadcast %5 : vector<1x512xf32> to vector<8x512xf32>
    %7 = arith.addf %4, %6 : vector<8x512xf32>
    %c0_6 = arith.constant 0 : index
    %c0_7 = arith.constant 0 : index
    %8 = vector.load %arg2[%c0_6, %c0_7] : memref<128x1024xbf16, #tpu.memory_space<vmem>>, vector<128x128xbf16>
    %c0_8 = arith.constant 0 : index
    %c0_9 = arith.constant 0 : index
    %9 = vector.load %arg3[%c0_8, %c0_9] : memref<1x1024xf32, #tpu.memory_space<vmem>>, vector<1x128xf32>
    %c0_10 = arith.constant 0 : index
    %c128 = arith.constant 128 : index
    %10 = vector.load %arg2[%c0_10, %c128] : memref<128x1024xbf16, #tpu.memory_space<vmem>>, vector<128x128xbf16>
    %c0_11 = arith.constant 0 : index
    %c128_12 = arith.constant 128 : index
    %11 = vector.load %arg3[%c0_11, %c128_12] : memref<1x1024xf32, #tpu.memory_space<vmem>>, vector<1x128xf32>
    %12 = vector.extract_strided_slice %7 {offsets = [0, 0], sizes = [8, 128], strides = [1, 1]} : vector<8x512xf32> to vector<8x128xf32>
    %13 = vector.extract_strided_slice %7 {offsets = [0, 128], sizes = [8, 128], strides = [1, 1]} : vector<8x512xf32> to vector<8x128xf32>
    %14 = arith.truncf %0 : vector<8x128xf32> to vector<8x128xbf16>
    %cst_13 = arith.constant dense<0.000000e+00> : vector<8x128xf32>
    %15 = tpu.matmul %14, %8, %cst_13 {dimension_numbers = #tpu.dot_dimension_numbers<[1], [0], [0], [1], [0, 0, 1, 1], [], []>} : vector<8x128xbf16>, vector<128x128xbf16>, vector<8x128xf32> -> vector<8x128xf32>
    %16 = vector.broadcast %9 : vector<1x128xf32> to vector<8x128xf32>
    %17 = arith.addf %15, %16 : vector<8x128xf32>
    %cst_14 = arith.constant 0.000000e+00 : f32
    %18 = vector.broadcast %cst_14 : f32 to vector<8x128xf32>
    %19 = arith.maximumf %17, %18 : vector<8x128xf32>
    %20 = arith.truncf %19 : vector<8x128xf32> to vector<8x128xbf16>
    %cst_15 = arith.constant dense<0.000000e+00> : vector<8x128xf32>
    %21 = tpu.matmul %20, %10, %cst_15 {dimension_numbers = #tpu.dot_dimension_numbers<[1], [0], [0], [1], [0, 0, 1, 1], [], []>} : vector<8x128xbf16>, vector<128x128xbf16>, vector<8x128xf32> -> vector<8x128xf32>
    %22 = vector.broadcast %11 : vector<1x128xf32> to vector<8x128xf32>
    %23 = arith.addf %21, %22 : vector<8x128xf32>
    %cst_16 = arith.constant dense<0.000000e+00> : vector<128xf32>
    %24 = vector.multi_reduction <add>, %23, %cst_16 [0] : vector<8x128xf32> to vector<128xf32>
    %25 = vector.shape_cast %24 : vector<128xf32> to vector<1x128xf32>
    %cst_17 = arith.constant 8.000000e+00 : f32
    %26 = vector.broadcast %cst_17 : f32 to vector<1x128xf32>
    %27 = arith.divf %25, %26 : vector<1x128xf32>
    %28 = vector.broadcast %27 : vector<1x128xf32> to vector<8x128xf32>
    %29 = arith.subf %23, %28 : vector<8x128xf32>
    %30 = vector.broadcast %27 : vector<1x128xf32> to vector<8x128xf32>
    %31 = arith.subf %23, %30 : vector<8x128xf32>
    %32 = arith.mulf %29, %31 : vector<8x128xf32>
    %cst_18 = arith.constant dense<0.000000e+00> : vector<128xf32>
    %33 = vector.multi_reduction <add>, %32, %cst_18 [0] : vector<8x128xf32> to vector<128xf32>
    %34 = vector.shape_cast %33 : vector<128xf32> to vector<1x128xf32>
    %cst_19 = arith.constant 8.000000e+00 : f32
    %35 = vector.broadcast %cst_19 : f32 to vector<1x128xf32>
    %36 = arith.divf %34, %35 : vector<1x128xf32>
    %37 = vector.broadcast %27 : vector<1x128xf32> to vector<8x128xf32>
    %38 = arith.subf %23, %37 : vector<8x128xf32>
    %cst_20 = arith.constant 9.99999974E-6 : f32
    %39 = vector.broadcast %cst_20 : f32 to vector<1x128xf32>
    %40 = arith.addf %36, %39 : vector<1x128xf32>
    %41 = math.rsqrt %40 : vector<1x128xf32>
    %42 = vector.broadcast %41 : vector<1x128xf32> to vector<8x128xf32>
    %43 = arith.mulf %38, %42 : vector<8x128xf32>
    %44 = arith.mulf %12, %43 : vector<8x128xf32>
    %45 = arith.addf %44, %13 : vector<8x128xf32>
    %cst_21 = arith.constant 0.000000e+00 : f32
    %46 = vector.broadcast %cst_21 : f32 to vector<8x128xf32>
    %47 = arith.maximumf %45, %46 : vector<8x128xf32>
    %48 = arith.addf %0, %47 : vector<8x128xf32>
    %c0_22 = arith.constant 0 : index
    %c256 = arith.constant 256 : index
    %49 = vector.load %arg2[%c0_22, %c256] : memref<128x1024xbf16, #tpu.memory_space<vmem>>, vector<128x128xbf16>
    %c0_23 = arith.constant 0 : index
    %c256_24 = arith.constant 256 : index
    %50 = vector.load %arg3[%c0_23, %c256_24] : memref<1x1024xf32, #tpu.memory_space<vmem>>, vector<1x128xf32>
    %c0_25 = arith.constant 0 : index
    %c384 = arith.constant 384 : index
    %51 = vector.load %arg2[%c0_25, %c384] : memref<128x1024xbf16, #tpu.memory_space<vmem>>, vector<128x128xbf16>
    %c0_26 = arith.constant 0 : index
    %c384_27 = arith.constant 384 : index
    %52 = vector.load %arg3[%c0_26, %c384_27] : memref<1x1024xf32, #tpu.memory_space<vmem>>, vector<1x128xf32>
    %53 = vector.extract_strided_slice %7 {offsets = [0, 256], sizes = [8, 128], strides = [1, 1]} : vector<8x512xf32> to vector<8x128xf32>
    %54 = vector.extract_strided_slice %7 {offsets = [0, 384], sizes = [8, 128], strides = [1, 1]} : vector<8x512xf32> to vector<8x128xf32>
    %55 = arith.truncf %48 : vector<8x128xf32> to vector<8x128xbf16>
    %cst_28 = arith.constant dense<0.000000e+00> : vector<8x128xf32>
    %56 = tpu.matmul %55, %49, %cst_28 {dimension_numbers = #tpu.dot_dimension_numbers<[1], [0], [0], [1], [0, 0, 1, 1], [], []>} : vector<8x128xbf16>, vector<128x128xbf16>, vector<8x128xf32> -> vector<8x128xf32>
    %57 = vector.broadcast %50 : vector<1x128xf32> to vector<8x128xf32>
    %58 = arith.addf %56, %57 : vector<8x128xf32>
    %cst_29 = arith.constant 0.000000e+00 : f32
    %59 = vector.broadcast %cst_29 : f32 to vector<8x128xf32>
    %60 = arith.maximumf %58, %59 : vector<8x128xf32>
    %61 = arith.truncf %60 : vector<8x128xf32> to vector<8x128xbf16>
    %cst_30 = arith.constant dense<0.000000e+00> : vector<8x128xf32>
    %62 = tpu.matmul %61, %51, %cst_30 {dimension_numbers = #tpu.dot_dimension_numbers<[1], [0], [0], [1], [0, 0, 1, 1], [], []>} : vector<8x128xbf16>, vector<128x128xbf16>, vector<8x128xf32> -> vector<8x128xf32>
    %63 = vector.broadcast %52 : vector<1x128xf32> to vector<8x128xf32>
    %64 = arith.addf %62, %63 : vector<8x128xf32>
    %cst_31 = arith.constant dense<0.000000e+00> : vector<128xf32>
    %65 = vector.multi_reduction <add>, %64, %cst_31 [0] : vector<8x128xf32> to vector<128xf32>
    %66 = vector.shape_cast %65 : vector<128xf32> to vector<1x128xf32>
    %cst_32 = arith.constant 8.000000e+00 : f32
    %67 = vector.broadcast %cst_32 : f32 to vector<1x128xf32>
    %68 = arith.divf %66, %67 : vector<1x128xf32>
    %69 = vector.broadcast %68 : vector<1x128xf32> to vector<8x128xf32>
    %70 = arith.subf %64, %69 : vector<8x128xf32>
    %71 = vector.broadcast %68 : vector<1x128xf32> to vector<8x128xf32>
    %72 = arith.subf %64, %71 : vector<8x128xf32>
    %73 = arith.mulf %70, %72 : vector<8x128xf32>
    %cst_33 = arith.constant dense<0.000000e+00> : vector<128xf32>
    %74 = vector.multi_reduction <add>, %73, %cst_33 [0] : vector<8x128xf32> to vector<128xf32>
    %75 = vector.shape_cast %74 : vector<128xf32> to vector<1x128xf32>
    %cst_34 = arith.constant 8.000000e+00 : f32
    %76 = vector.broadcast %cst_34 : f32 to vector<1x128xf32>
    %77 = arith.divf %75, %76 : vector<1x128xf32>
    %78 = vector.broadcast %68 : vector<1x128xf32> to vector<8x128xf32>
    %79 = arith.subf %64, %78 : vector<8x128xf32>
    %cst_35 = arith.constant 9.99999974E-6 : f32
    %80 = vector.broadcast %cst_35 : f32 to vector<1x128xf32>
    %81 = arith.addf %77, %80 : vector<1x128xf32>
    %82 = math.rsqrt %81 : vector<1x128xf32>
    %83 = vector.broadcast %82 : vector<1x128xf32> to vector<8x128xf32>
    %84 = arith.mulf %79, %83 : vector<8x128xf32>
    %85 = arith.mulf %53, %84 : vector<8x128xf32>
    %86 = arith.addf %85, %54 : vector<8x128xf32>
    %cst_36 = arith.constant 0.000000e+00 : f32
    %87 = vector.broadcast %cst_36 : f32 to vector<8x128xf32>
    %88 = arith.maximumf %86, %87 : vector<8x128xf32>
    %89 = arith.addf %48, %88 : vector<8x128xf32>
    %c0_37 = arith.constant 0 : index
    %c0_38 = arith.constant 0 : index
    %90 = vector.load %arg4[%c0_37, %c0_38] : memref<8x128xf32, #tpu.memory_space<vmem>>, vector<8x128xf32>
    tpu.vector_store %arg4[%c0_37, %c0_38], %89 {strides = array<i32>} : memref<8x128xf32, #tpu.memory_space<vmem>>, vector<8x128xf32>,
    return
  }
}

</mosaic_0001>

<llo_original>
// kernel: tpu_custom_call.1
$region0: #{tpu_custom_call.1}
  #allocation0 [shape = 'u32[]', space=smem, size = 0x4, offset = 0x4, fixed_abs, tag = 'smem constant byte address 0x4 - core index']
  #allocation1 [shape = 'u32[72,128]{1,0:T(1,128)}', space=vmem, size = 0x9000, scoped, tag = 'internal scratch']
  %s0 = inlined_call_operand.hbm [shape: f32[8,128], index: 0, kind: input, shape index: {}]
  %s1 = inlined_call_operand.hbm [shape: f32[8,128], index: 1, kind: input, shape index: {}]
  %s2 = inlined_call_operand.hbm [shape: bf16[128,1024], index: 2, kind: input, shape index: {}]
  %s3 = inlined_call_operand.hbm [shape: f32[1,1024], index: 3, kind: input, shape index: {}]
  %s4 = inlined_call_operand.hbm [shape: f32[8,128], index: 4, kind: output, shape index: {}]
  %s5 = sld [smem:[#allocation0]]
  $region42: #{tpu_custom_call.1} parent=0
    _
  %s7 = ssub.s32 1, %s5
  %s8 = scalar_select 0, %s7, %s5
  $region1: #{tpu_custom_call.1} parent=0
    #allocation2 [shape = 'u8[4096]{0}', space=vmem, size = 0x1000, scoped, tag = 'input window, operand 0, single buffered']
    #allocation3 [shape = 's32[1]{0}', space=sflag, size = 0x4, scoped, tag = 'scoped memory for tpu_custom_call.1']
    #allocation4 [shape = 's32[1]{0}', space=sflag, size = 0x4, scoped, tag = 'scoped memory for tpu_custom_call.1']
    #allocation5 [shape = 'u8[4096]{0}', space=vmem, size = 0x1000, scoped, tag = 'input window, operand 1, single buffered']
    #allocation6 [shape = 's32[1]{0}', space=sflag, size = 0x4, scoped, tag = 'scoped memory for tpu_custom_call.1']
    #allocation7 [shape = 'u8[262144]{0}', space=vmem, size = 0x40000, scoped, tag = 'input window, operand 2, single buffered']
    #allocation8 [shape = 'u8[4096]{0}', space=vmem, size = 0x1000, scoped, tag = 'input window, operand 3, single buffered']
    #allocation9 [shape = 's32[1]{0}', space=sflag, size = 0x4, scoped, tag = 'scoped memory for tpu_custom_call.1']
    #allocation10 [shape = 'u8[4096]{0}', space=vmem, size = 0x1000, scoped, tag = 'output window, operand 0, single buffered']
    %9 = vsyncpa [#allocation3], 0
    %10 = vsyncpa [#allocation6], 0
    %11 = vsyncpa [#allocation9], 0
    %12 = vsyncpa [#allocation4], 0
    // Predicated region
    $region2: #{tpu_custom_call.1} parent=1 // pred_check
      _
    $region3: #{tpu_custom_call.1} parent=1 // pred_check_branch
      %14 = sbr.rel (0) target = $region5
    $region4: #{tpu_custom_call.1} parent=1 // pred_region
      %16 = vsyncadd [#allocation3], 0
      %s18 = sshll.u32 %s0, 4
      %s19 = int_to_ptr.hbm [resolvable:$true] %s18
      %s20 = sshll.u32 [#allocation2], 4
      %s21 = int_to_ptr.vmem [resolvable:$true] %s20
      %23 = dma.hbm_to_vmem [thread:$0]  %s19, 128, %s21, [#allocation3]
    $region5: #{tpu_custom_call.1} parent=1 // pred_fallthru
      _
    // Predicated region
    $region6: #{tpu_custom_call.1} parent=1 // pred_check
      _
    $region7: #{tpu_custom_call.1} parent=1 // pred_check_branch
      %25 = sbr.rel (0) target = $region9
    $region8: #{tpu_custom_call.1} parent=1 // pred_region
      %27 = vsyncadd [#allocation6], 0
      %s29 = sshll.u32 %s1, 4
      %s30 = int_to_ptr.hbm [resolvable:$true] %s29
      %s31 = sshll.u32 [#allocation5], 4
      %s32 = int_to_ptr.vmem [resolvable:$true] %s31
      %34 = dma.hbm_to_vmem [thread:$0]  %s30, 128, %s32, [#allocation6]
    $region9: #{tpu_custom_call.1} parent=1 // pred_fallthru
      _
    // Predicated region
    $region10: #{tpu_custom_call.1} parent=1 // pred_check
      _
    $region11: #{tpu_custom_call.1} parent=1 // pred_check_branch
      %36 = sbr.rel (0) target = $region13
    $region12: #{tpu_custom_call.1} parent=1 // pred_region
      %38 = vsyncadd [#allocation6], 0
      %s39 = sshll.u32 %s2, 4
      %s40 = int_to_ptr.hbm [resolvable:$true] %s39
      %s41 = sshll.u32 [#allocation7], 4
      %s42 = int_to_ptr.vmem [resolvable:$true] %s41
      %47 = dma.hbm_to_vmem [thread:$0]  %s40, 8192, %s42, [#allocation6], 512, 512, 32
    $region13: #{tpu_custom_call.1} parent=1 // pred_fallthru
      _
    // Predicated region
    $region14: #{tpu_custom_call.1} parent=1 // pred_check
      _
    $region15: #{tpu_custom_call.1} parent=1 // pred_check_branch
      %49 = sbr.rel (0) target = $region17
    $region16: #{tpu_custom_call.1} parent=1 // pred_region
      %51 = vsyncadd [#allocation9], 0
      %s53 = sshll.u32 %s3, 4
      %s54 = int_to_ptr.hbm [resolvable:$true] %s53
      %s55 = sshll.u32 [#allocation8], 4
      %s56 = int_to_ptr.vmem [resolvable:$true] %s55
      %58 = dma.hbm_to_vmem [thread:$0]  %s54, 128, %s56, [#allocation9]
    $region17: #{tpu_custom_call.1} parent=1 // pred_fallthru
      _
    // Predicated region
    $region18: #{tpu_custom_call.1} parent=1 // pred_check
      _
    $region19: #{tpu_custom_call.1} parent=1 // pred_check_branch
      %60 = sbr.rel (0) target = $region21
    $region20: #{tpu_custom_call.1} parent=1 // pred_region
      %62 = dma.done [#allocation3], 128
    $region21: #{tpu_custom_call.1} parent=1 // pred_fallthru
      _
    // Predicated region
    $region22: #{tpu_custom_call.1} parent=1 // pred_check
      _
    $region23: #{tpu_custom_call.1} parent=1 // pred_check_branch
      %64 = sbr.rel (0) target = $region25
    $region24: #{tpu_custom_call.1} parent=1 // pred_region
      %66 = dma.done [#allocation6], 128
    $region25: #{tpu_custom_call.1} parent=1 // pred_fallthru
      _
    // Predicated region
    $region26: #{tpu_custom_call.1} parent=1 // pred_check
      _
    $region27: #{tpu_custom_call.1} parent=1 // pred_check_branch
      %68 = sbr.rel (0) target = $region29
    $region28: #{tpu_custom_call.1} parent=1 // pred_region
      %70 = dma.done [#allocation6], 8192
    $region29: #{tpu_custom_call.1} parent=1 // pred_fallthru
      _
    // Predicated region
    $region30: #{tpu_custom_call.1} parent=1 // pred_check
      _
    $region31: #{tpu_custom_call.1} parent=1 // pred_check_branch
      %72 = sbr.rel (0) target = $region33
    $region32: #{tpu_custom_call.1} parent=1 // pred_region
      %74 = dma.done [#allocation9], 128
    $region33: #{tpu_custom_call.1} parent=1 // pred_fallthru
      _
    %v75 = vld [vmem:[#allocation2] sm:$0xff]
    %v76 = vld [vmem:[#allocation5] sm:$0xff]
    %v77 = vld [vmem:[#allocation7 + $0x10] sm:$0xff]
    %v78 = vld [vmem:[#allocation7 + $0x18] sm:$0xff]
    %v79 = vld [vmem:[#allocation7 + $0x30] sm:$0xff]
    %v80 = vld [vmem:[#allocation7 + $0x38] sm:$0xff]
    %v81 = vld [vmem:[#allocation7 + $0x50] sm:$0xff]
    %v82 = vld [vmem:[#allocation7 + $0x58] sm:$0xff]
    %v83 = vld [vmem:[#allocation7 + $0x70] sm:$0xff]
    %v84 = vld [vmem:[#allocation7 + $0x78] sm:$0xff]
    %v85 = vld [vmem:[#allocation7 + $0x90] sm:$0xff]
    %v86 = vld [vmem:[#allocation7 + $0x98] sm:$0xff]
    %v87 = vld [vmem:[#allocation7 + $0xb0] sm:$0xff]
    %v88 = vld [vmem:[#allocation7 + $0xb8] sm:$0xff]
    %v89 = vld [vmem:[#allocation7 + $0xd0] sm:$0xff]
    %v90 = vld [vmem:[#allocation7 + $0xd8] sm:$0xff]
    %v91 = vld [vmem:[#allocation7 + $0xf0] sm:$0xff]
    %v92 = vld [vmem:[#allocation7 + $0xf8] sm:$0xff]
    %v93 = vld [vmem:[#allocation7 + $0x110] sm:$0xff]
    %v94 = vld [vmem:[#allocation7 + $0x118] sm:$0xff]
    %v95 = vld [vmem:[#allocation7 + $0x130] sm:$0xff]
    %v96 = vld [vmem:[#allocation7 + $0x138] sm:$0xff]
    %v97 = vld [vmem:[#allocation7 + $0x150] sm:$0xff]
    %v98 = vld [vmem:[#allocation7 + $0x158] sm:$0xff]
    %v99 = vld [vmem:[#allocation7 + $0x170] sm:$0xff]
    %v100 = vld [vmem:[#allocation7 + $0x178] sm:$0xff]
    %v101 = vld [vmem:[#allocation7 + $0x190] sm:$0xff]
    %v102 = vld [vmem:[#allocation7 + $0x198] sm:$0xff]
    %v103 = vld [vmem:[#allocation7 + $0x1b0] sm:$0xff]
    %v104 = vld [vmem:[#allocation7 + $0x1b8] sm:$0xff]
    %v105 = vld [vmem:[#allocation7 + $0x1d0] sm:$0xff]
    %v106 = vld [vmem:[#allocation7 + $0x1d8] sm:$0xff]
    %v107 = vld [vmem:[#allocation7 + $0x1f0] sm:$0xff]
    %v108 = vld [vmem:[#allocation7 + $0x1f8] sm:$0xff]
    %v109 = vpack.c.bf16 %v76, %v76
    %v110 = vld [vmem:[#allocation8 + $0x4] sm:$0xf]
    %v112 = vperm.slane %v110, 0
    %v113 = vperm.slane %v110, 1
    %v114 = vperm.slane %v110, 2
    %v115 = vperm.slane %v110, 3
    %v152 = vunpack.c.l.b16 %v77
    %v153 = vunpack.c.h.b16 %v77
    %v154 = vunpack.c.l.b16 %v78
    %v155 = vunpack.c.h.b16 %v78
    %v156 = vunpack.c.l.b16 %v79
    %v157 = vunpack.c.h.b16 %v79
    %v158 = vunpack.c.l.b16 %v80
    %v159 = vunpack.c.h.b16 %v80
    %v160 = vunpack.c.l.b16 %v81
    %v161 = vunpack.c.h.b16 %v81
    %v162 = vunpack.c.l.b16 %v82
    %v163 = vunpack.c.h.b16 %v82
    %v164 = vunpack.c.l.b16 %v83
    %v165 = vunpack.c.h.b16 %v83
    %v166 = vunpack.c.l.b16 %v84
    %v167 = vunpack.c.h.b16 %v84
    %v168 = vunpack.c.l.b16 %v85
    %v169 = vunpack.c.h.b16 %v85
    %v170 = vunpack.c.l.b16 %v86
    %v171 = vunpack.c.h.b16 %v86
    %v172 = vunpack.c.l.b16 %v87
    %v173 = vunpack.c.h.b16 %v87
    %v174 = vunpack.c.l.b16 %v88
    %v175 = vunpack.c.h.b16 %v88
    %v176 = vunpack.c.l.b16 %v89
    %v177 = vunpack.c.h.b16 %v89
    %v178 = vunpack.c.l.b16 %v90
    %v179 = vunpack.c.h.b16 %v90
    %v180 = vunpack.c.l.b16 %v91
    %v181 = vunpack.c.h.b16 %v91
    %v182 = vunpack.c.l.b16 %v92
    %v183 = vunpack.c.h.b16 %v92
    %v184 = vunpack.c.l.b16 %v93
    %v185 = vunpack.c.h.b16 %v93
    %v186 = vunpack.c.l.b16 %v94
    %v187 = vunpack.c.h.b16 %v94
    %v188 = vunpack.c.l.b16 %v95
    %v189 = vunpack.c.h.b16 %v95
    %v190 = vunpack.c.l.b16 %v96
    %v191 = vunpack.c.h.b16 %v96
    %v192 = vunpack.c.l.b16 %v97
    %v193 = vunpack.c.h.b16 %v97
    %v194 = vunpack.c.l.b16 %v98
    %v195 = vunpack.c.h.b16 %v98
    %v196 = vunpack.c.l.b16 %v99
    %v197 = vunpack.c.h.b16 %v99
    %v198 = vunpack.c.l.b16 %v100
    %v199 = vunpack.c.h.b16 %v100
    %v200 = vunpack.c.l.b16 %v101
    %v201 = vunpack.c.h.b16 %v101
    %v202 = vunpack.c.l.b16 %v102
    %v203 = vunpack.c.h.b16 %v102
    %v204 = vunpack.c.l.b16 %v103
    %v205 = vunpack.c.h.b16 %v103
    %v206 = vunpack.c.l.b16 %v104
    %v207 = vunpack.c.h.b16 %v104
    %v208 = vunpack.c.l.b16 %v105
    %v209 = vunpack.c.h.b16 %v105
    %v210 = vunpack.c.l.b16 %v106
    %v211 = vunpack.c.h.b16 %v106
    %v212 = vunpack.c.l.b16 %v107
    %v213 = vunpack.c.h.b16 %v107
    %v214 = vunpack.c.l.b16 %v108
    %v215 = vunpack.c.h.b16 %v108
    %v216 = vpack.c.b16 %v156, %v152
    %v217 = vpack.c.b16 %v157, %v153
    %v218 = vpack.c.b16 %v158, %v154
    %v219 = vpack.c.b16 %v159, %v155
    %v220 = vpack.c.b16 %v164, %v160
    %v221 = vpack.c.b16 %v165, %v161
    %v222 = vpack.c.b16 %v166, %v162
    %v223 = vpack.c.b16 %v167, %v163
    %v224 = vpack.c.b16 %v172, %v168
    %v225 = vpack.c.b16 %v173, %v169
    %v226 = vpack.c.b16 %v174, %v170
    %v227 = vpack.c.b16 %v175, %v171
    %v228 = vpack.c.b16 %v180, %v176
    %v229 = vpack.c.b16 %v181, %v177
    %v230 = vpack.c.b16 %v182, %v178
    %v231 = vpack.c.b16 %v183, %v179
    %v232 = vpack.c.b16 %v188, %v184
    %v233 = vpack.c.b16 %v189, %v185
    %v234 = vpack.c.b16 %v190, %v186
    %v235 = vpack.c.b16 %v191, %v187
    %v236 = vpack.c.b16 %v196, %v192
    %v237 = vpack.c.b16 %v197, %v193
    %v238 = vpack.c.b16 %v198, %v194
    %v239 = vpack.c.b16 %v199, %v195
    %v240 = vpack.c.b16 %v204, %v200
    %v241 = vpack.c.b16 %v205, %v201
    %v242 = vpack.c.b16 %v206, %v202
    %v243 = vpack.c.b16 %v207, %v203
    %v244 = vpack.c.b16 %v212, %v208
    %v245 = vpack.c.b16 %v213, %v209
    %v246 = vpack.c.b16 %v214, %v210
    %v247 = vpack.c.b16 %v215, %v211
    %280 = vmatpush.bf16.msra.mxu0 %v244
    %281 = vmatpush.bf16.msra.mxu0 %v240
    %282 = vmatpush.bf16.msra.mxu0 %v236
    %283 = vmatpush.bf16.msra.mxu0 %v232
    %284 = vmatpush.bf16.msra.mxu0 %v228
    %285 = vmatpush.bf16.msra.mxu0 %v224
    %286 = vmatpush.bf16.msra.mxu0 %v220
    %287 = vmatpush.bf16.msra.mxu0 %v216
    %288 = vmatmul.bf16.gmra.mxu0 %v109
    %v289 = vpop.f32.mrf.mxu0
    %v290 = vadd.f32 %v112, %v289
    %v291 = vpop.f32.mrf.mxu0
    %292 = vdwg.mxu0
    %293 = vmatpush.bf16.msra.mxu0 %v245
    %294 = vmatpush.bf16.msra.mxu0 %v241
    %295 = vmatpush.bf16.msra.mxu0 %v237
    %296 = vmatpush.bf16.msra.mxu0 %v233
    %297 = vmatpush.bf16.msra.mxu0 %v229
    %298 = vmatpush.bf16.msra.mxu0 %v225
    %299 = vmatpush.bf16.msra.mxu0 %v221
    %300 = vmatpush.bf16.msra.mxu0 %v217
    %301 = vmatmul.bf16.gmra.mxu0 %v109
    %v302 = vpop.f32.mrf.mxu0
    %v303 = vadd.f32 %v113, %v302
    %v304 = vpop.f32.mrf.mxu0
    %305 = vdwg.mxu0
    %306 = vmatpush.bf16.msra.mxu0 %v246
    %307 = vmatpush.bf16.msra.mxu0 %v242
    %308 = vmatpush.bf16.msra.mxu0 %v238
    %309 = vmatpush.bf16.msra.mxu0 %v234
    %310 = vmatpush.bf16.msra.mxu0 %v230
    %311 = vmatpush.bf16.msra.mxu0 %v226
    %312 = vmatpush.bf16.msra.mxu0 %v222
    %313 = vmatpush.bf16.msra.mxu0 %v218
    %314 = vmatmul.bf16.gmra.mxu0 %v109
    %v315 = vpop.f32.mrf.mxu0
    %v316 = vadd.f32 %v114, %v315
    %v317 = vpop.f32.mrf.mxu0
    %318 = vdwg.mxu0
    %319 = vmatpush.bf16.msra.mxu0 %v247
    %320 = vmatpush.bf16.msra.mxu0 %v243
    %321 = vmatpush.bf16.msra.mxu0 %v239
    %322 = vmatpush.bf16.msra.mxu0 %v235
    %323 = vmatpush.bf16.msra.mxu0 %v231
    %324 = vmatpush.bf16.msra.mxu0 %v227
    %325 = vmatpush.bf16.msra.mxu0 %v223
    %326 = vmatpush.bf16.msra.mxu0 %v219
    %327 = vmatmul.bf16.gmra.mxu0 %v109
    %v328 = vpop.f32.mrf.mxu0
    %v329 = vadd.f32 %v115, %v328
    %v330 = vpop.f32.mrf.mxu0
    %331 = vdwg.mxu0
    %v332 = vld [vmem:[#allocation7] sm:$0xf]
    %v333 = vld [vmem:[#allocation7 + $0x20] sm:$0xf]
    %v334 = vld [vmem:[#allocation7 + $0x40] sm:$0xf]
    %v335 = vld [vmem:[#allocation7 + $0x60] sm:$0xf]
    %v336 = vld [vmem:[#allocation7 + $0x80] sm:$0xf]
    %v337 = vld [vmem:[#allocation7 + $0xa0] sm:$0xf]
    %v338 = vld [vmem:[#allocation7 + $0xc0] sm:$0xf]
    %v339 = vld [vmem:[#allocation7 + $0xe0] sm:$0xf]
    %v340 = vld [vmem:[#allocation7 + $0x100] sm:$0xf]
    %v341 = vld [vmem:[#allocation7 + $0x120] sm:$0xf]
    %v342 = vld [vmem:[#allocation7 + $0x140] sm:$0xf]
    %v343 = vld [vmem:[#allocation7 + $0x160] sm:$0xf]
    %v344 = vld [vmem:[#allocation7 + $0x180] sm:$0xf]
    %v345 = vld [vmem:[#allocation7 + $0x1a0] sm:$0xf]
    %v346 = vld [vmem:[#allocation7 + $0x1c0] sm:$0xf]
    %v347 = vld [vmem:[#allocation7 + $0x1e0] sm:$0xf]
    %v348 = vld [vmem:[#allocation8] sm:$0x1]
    %v349 = vld [vmem:[#allocation7 + $0x4] sm:$0xf]
    %v350 = vld [vmem:[#allocation7 + $0x24] sm:$0xf]
    %v351 = vld [vmem:[#allocation7 + $0x44] sm:$0xf]
    %v352 = vld [vmem:[#allocation7 + $0x64] sm:$0xf]
    %v353 = vld [vmem:[#allocation7 + $0x84] sm:$0xf]
    %v354 = vld [vmem:[#allocation7 + $0xa4] sm:$0xf]
    %v355 = vld [vmem:[#allocation7 + $0xc4] sm:$0xf]
    %v356 = vld [vmem:[#allocation7 + $0xe4] sm:$0xf]
    %v357 = vld [vmem:[#allocation7 + $0x104] sm:$0xf]
    %v358 = vld [vmem:[#allocation7 + $0x124] sm:$0xf]
    %v359 = vld [vmem:[#allocation7 + $0x144] sm:$0xf]
    %v360 = vld [vmem:[#allocation7 + $0x164] sm:$0xf]
    %v361 = vld [vmem:[#allocation7 + $0x184] sm:$0xf]
    %v362 = vld [vmem:[#allocation7 + $0x1a4] sm:$0xf]
    %v363 = vld [vmem:[#allocation7 + $0x1c4] sm:$0xf]
    %v364 = vld [vmem:[#allocation7 + $0x1e4] sm:$0xf]
    %v365 = vld [vmem:[#allocation8 + $0x1] sm:$0x1]
    %v366 = vpack.c.bf16 %v75, %v75
    %v368 = vperm.slane %v348, 0
    %v386 = vunpack.c.l.b16 %v332
    %v387 = vunpack.c.l.b16 %v333
    %v388 = vunpack.c.l.b16 %v334
    %v389 = vunpack.c.l.b16 %v335
    %v390 = vunpack.c.l.b16 %v336
    %v391 = vunpack.c.l.b16 %v337
    %v392 = vunpack.c.l.b16 %v338
    %v393 = vunpack.c.l.b16 %v339
    %v394 = vunpack.c.l.b16 %v340
    %v395 = vunpack.c.l.b16 %v341
    %v396 = vunpack.c.l.b16 %v342
    %v397 = vunpack.c.l.b16 %v343
    %v398 = vunpack.c.l.b16 %v344
    %v399 = vunpack.c.l.b16 %v345
    %v400 = vunpack.c.l.b16 %v346
    %v401 = vunpack.c.l.b16 %v347
    %v402 = vpack.c.b16 %v387, %v386
    %v403 = vpack.c.b16 %v389, %v388
    %v404 = vpack.c.b16 %v391, %v390
    %v405 = vpack.c.b16 %v393, %v392
    %v406 = vpack.c.b16 %v395, %v394
    %v407 = vpack.c.b16 %v397, %v396
    %v408 = vpack.c.b16 %v399, %v398
    %v409 = vpack.c.b16 %v401, %v400
    %418 = vmatpush.bf16.msra.mxu0 %v409
    %419 = vmatpush.bf16.msra.mxu0 %v408
    %420 = vmatpush.bf16.msra.mxu0 %v407
    %421 = vmatpush.bf16.msra.mxu0 %v406
    %422 = vmatpush.bf16.msra.mxu0 %v405
    %423 = vmatpush.bf16.msra.mxu0 %v404
    %424 = vmatpush.bf16.msra.mxu0 %v403
    %425 = vmatpush.bf16.msra.mxu0 %v402
    %426 = vmatmul.bf16.gmra.mxu0 %v366
    %v427 = vpop.f32.mrf.mxu0
    %v428 = vadd.f32 %v368, %v427
    %v429 = vpop.f32.mrf.mxu0
    %430 = vdwg.mxu0
    %v431 = vmax.f32 %v428, 0.0
    %v432 = vpack.c.bf16 %v431, %v431
    %v434 = vperm.slane %v365, 0
    %v452 = vunpack.c.l.b16 %v349
    %v453 = vunpack.c.l.b16 %v350
    %v454 = vunpack.c.l.b16 %v351
    %v455 = vunpack.c.l.b16 %v352
    %v456 = vunpack.c.l.b16 %v353
    %v457 = vunpack.c.l.b16 %v354
    %v458 = vunpack.c.l.b16 %v355
    %v459 = vunpack.c.l.b16 %v356
    %v460 = vunpack.c.l.b16 %v357
    %v461 = vunpack.c.l.b16 %v358
    %v462 = vunpack.c.l.b16 %v359
    %v463 = vunpack.c.l.b16 %v360
    %v464 = vunpack.c.l.b16 %v361
    %v465 = vunpack.c.l.b16 %v362
    %v466 = vunpack.c.l.b16 %v363
    %v467 = vunpack.c.l.b16 %v364
    %v468 = vpack.c.b16 %v453, %v452
    %v469 = vpack.c.b16 %v455, %v454
    %v470 = vpack.c.b16 %v457, %v456
    %v471 = vpack.c.b16 %v459, %v458
    %v472 = vpack.c.b16 %v461, %v460
    %v473 = vpack.c.b16 %v463, %v462
    %v474 = vpack.c.b16 %v465, %v464
    %v475 = vpack.c.b16 %v467, %v466
    %484 = vmatpush.bf16.msra.mxu0 %v475
    %485 = vmatpush.bf16.msra.mxu0 %v474
    %486 = vmatpush.bf16.msra.mxu0 %v473
    %487 = vmatpush.bf16.msra.mxu0 %v472
    %488 = vmatpush.bf16.msra.mxu0 %v471
    %489 = vmatpush.bf16.msra.mxu0 %v470
    %490 = vmatpush.bf16.msra.mxu0 %v469
    %491 = vmatpush.bf16.msra.mxu0 %v468
    %492 = vmatmul.bf16.gmra.mxu0 %v432
    %v493 = vpop.f32.mrf.mxu0
    %v494 = vadd.f32 %v434, %v493
    %v495 = vpop.f32.mrf.mxu0
    %496 = vdwg.mxu0
    %v497 = vrot.slane %v494, 4
    %v498 = vadd.f32 %v494, %v497
    %v499 = vrot.slane %v498, 2
    %v500 = vadd.f32 %v498, %v499
    %v501 = vrot.slane %v500, 1
    %v502 = vadd.f32 %v500, %v501
    %v503 = vrcp.pop 8.0
    %v504 = vmul.f32 8.0, %v503
    %v505 = vsub.f32 1.0, %v504
    %v506 = vmul.f32 %v503, %v505
    %v507 = vadd.f32 %v503, %v506
    %vm508 = vweird.f32 %v503
    %v509 = vsel %vm508, %v503, %v507
    %v510 = vmul.f32 %v502, %v509
    %v511 = vsub.f32 %v494, %v510
    %v512 = vmul.f32 %v511, %v511
    %v513 = vrot.slane %v512, 4
    %v514 = vadd.f32 %v512, %v513
    %v515 = vrot.slane %v514, 2
    %v516 = vadd.f32 %v514, %v515
    %v517 = vrot.slane %v516, 1
    %v518 = vadd.f32 %v516, %v517
    %v519 = vmul.f32 %v518, %v509
    %v520 = vadd.f32 %v519, 1e-05
    %v521 = vrsqrt.pop %v520
    %v522 = vmul.f32 %v521, %v520
    %v523 = vmul.f32 %v522, %v521
    %v524 = vmul.f32 0.5, %v523
    %v525 = vsub.f32 1.5, %v524
    %v526 = vmul.f32 %v521, %v525
    %vm527 = vweird.f32 %v520
    %vm528 = vweird.f32 %v521
    %vm529 = vmor %vm527, %vm528
    %v530 = vsel %vm529, %v521, %v526
    %v531 = vmul.f32 %v511, %v530
    %v532 = vmul.f32 %v290, %v531
    %v533 = vadd.f32 %v532, %v303
    %v534 = vmax.f32 %v533, 0.0
    %v535 = vadd.f32 %v75, %v534
    %v536 = vld [vmem:[#allocation7 + $0x8] sm:$0xf]
    %v537 = vld [vmem:[#allocation7 + $0x28] sm:$0xf]
    %v538 = vld [vmem:[#allocation7 + $0x48] sm:$0xf]
    %v539 = vld [vmem:[#allocation7 + $0x68] sm:$0xf]
    %v540 = vld [vmem:[#allocation7 + $0x88] sm:$0xf]
    %v541 = vld [vmem:[#allocation7 + $0xa8] sm:$0xf]
    %v542 = vld [vmem:[#allocation7 + $0xc8] sm:$0xf]
    %v543 = vld [vmem:[#allocation7 + $0xe8] sm:$0xf]
    %v544 = vld [vmem:[#allocation7 + $0x108] sm:$0xf]
    %v545 = vld [vmem:[#allocation7 + $0x128] sm:$0xf]
    %v546 = vld [vmem:[#allocation7 + $0x148] sm:$0xf]
    %v547 = vld [vmem:[#allocation7 + $0x168] sm:$0xf]
    %v548 = vld [vmem:[#allocation7 + $0x188] sm:$0xf]
    %v549 = vld [vmem:[#allocation7 + $0x1a8] sm:$0xf]
    %v550 = vld [vmem:[#allocation7 + $0x1c8] sm:$0xf]
    %v551 = vld [vmem:[#allocation7 + $0x1e8] sm:$0xf]
    %v552 = vld [vmem:[#allocation8 + $0x2] sm:$0x1]
    %v553 = vld [vmem:[#allocation7 + $0xc] sm:$0xf]
    %v554 = vld [vmem:[#allocation7 + $0x2c] sm:$0xf]
    %v555 = vld [vmem:[#allocation7 + $0x4c] sm:$0xf]
    %v556 = vld [vmem:[#allocation7 + $0x6c] sm:$0xf]
    %v557 = vld [vmem:[#allocation7 + $0x8c] sm:$0xf]
    %v558 = vld [vmem:[#allocation7 + $0xac] sm:$0xf]
    %v559 = vld [vmem:[#allocation7 + $0xcc] sm:$0xf]
    %v560 = vld [vmem:[#allocation7 + $0xec] sm:$0xf]
    %v561 = vld [vmem:[#allocation7 + $0x10c] sm:$0xf]
    %v562 = vld [vmem:[#allocation7 + $0x12c] sm:$0xf]
    %v563 = vld [vmem:[#allocation7 + $0x14c] sm:$0xf]
    %v564 = vld [vmem:[#allocation7 + $0x16c] sm:$0xf]
    %v565 = vld [vmem:[#allocation7 + $0x18c] sm:$0xf]
    %v566 = vld [vmem:[#allocation7 + $0x1ac] sm:$0xf]
    %v567 = vld [vmem:[#allocation7 + $0x1cc] sm:$0xf]
    %v568 = vld [vmem:[#allocation7 + $0x1ec] sm:$0xf]
    %v569 = vld [vmem:[#allocation8 + $0x3] sm:$0x1]
    %v570 = vpack.c.bf16 %v535, %v535
    %v572 = vperm.slane %v552, 0
    %v590 = vunpack.c.l.b16 %v536
    %v591 = vunpack.c.l.b16 %v537
    %v592 = vunpack.c.l.b16 %v538
    %v593 = vunpack.c.l.b16 %v539
    %v594 = vunpack.c.l.b16 %v540
    %v595 = vunpack.c.l.b16 %v541
    %v596 = vunpack.c.l.b16 %v542
    %v597 = vunpack.c.l.b16 %v543
    %v598 = vunpack.c.l.b16 %v544
    %v599 = vunpack.c.l.b16 %v545
    %v600 = vunpack.c.l.b16 %v546
    %v601 = vunpack.c.l.b16 %v547
    %v602 = vunpack.c.l.b16 %v548
    %v603 = vunpack.c.l.b16 %v549
    %v604 = vunpack.c.l.b16 %v550
    %v605 = vunpack.c.l.b16 %v551
    %v606 = vpack.c.b16 %v591, %v590
    %v607 = vpack.c.b16 %v593, %v592
    %v608 = vpack.c.b16 %v595, %v594
    %v609 = vpack.c.b16 %v597, %v596
    %v610 = vpack.c.b16 %v599, %v598
    %v611 = vpack.c.b16 %v601, %v600
    %v612 = vpack.c.b16 %v603, %v602
    %v613 = vpack.c.b16 %v605, %v604
    %622 = vmatpush.bf16.msra.mxu0 %v613
    %623 = vmatpush.bf16.msra.mxu0 %v612
    %624 = vmatpush.bf16.msra.mxu0 %v611
    %625 = vmatpush.bf16.msra.mxu0 %v610
    %626 = vmatpush.bf16.msra.mxu0 %v609
    %627 = vmatpush.bf16.msra.mxu0 %v608
    %628 = vmatpush.bf16.msra.mxu0 %v607
    %629 = vmatpush.bf16.msra.mxu0 %v606
    %630 = vmatmul.bf16.gmra.mxu0 %v570
    %v631 = vpop.f32.mrf.mxu0
    %v632 = vadd.f32 %v572, %v631
    %v633 = vpop.f32.mrf.mxu0
    %634 = vdwg.mxu0
    %v635 = vmax.f32 %v632, 0.0
    %v636 = vpack.c.bf16 %v635, %v635
    %v638 = vperm.slane %v569, 0
    %v656 = vunpack.c.l.b16 %v553
    %v657 = vunpack.c.l.b16 %v554
    %v658 = vunpack.c.l.b16 %v555
    %v659 = vunpack.c.l.b16 %v556
    %v660 = vunpack.c.l.b16 %v557
    %v661 = vunpack.c.l.b16 %v558
    %v662 = vunpack.c.l.b16 %v559
    %v663 = vunpack.c.l.b16 %v560
    %v664 = vunpack.c.l.b16 %v561
    %v665 = vunpack.c.l.b16 %v562
    %v666 = vunpack.c.l.b16 %v563
    %v667 = vunpack.c.l.b16 %v564
    %v668 = vunpack.c.l.b16 %v565
    %v669 = vunpack.c.l.b16 %v566
    %v670 = vunpack.c.l.b16 %v567
    %v671 = vunpack.c.l.b16 %v568
    %v672 = vpack.c.b16 %v657, %v656
    %v673 = vpack.c.b16 %v659, %v658
    %v674 = vpack.c.b16 %v661, %v660
    %v675 = vpack.c.b16 %v663, %v662
    %v676 = vpack.c.b16 %v665, %v664
    %v677 = vpack.c.b16 %v667, %v666
    %v678 = vpack.c.b16 %v669, %v668
    %v679 = vpack.c.b16 %v671, %v670
    %688 = vmatpush.bf16.msra.mxu0 %v679
    %689 = vmatpush.bf16.msra.mxu0 %v678
    %690 = vmatpush.bf16.msra.mxu0 %v677
    %691 = vmatpush.bf16.msra.mxu0 %v676
    %692 = vmatpush.bf16.msra.mxu0 %v675
    %693 = vmatpush.bf16.msra.mxu0 %v674
    %694 = vmatpush.bf16.msra.mxu0 %v673
    %695 = vmatpush.bf16.msra.mxu0 %v672
    %696 = vmatmul.bf16.gmra.mxu0 %v636
    %v697 = vpop.f32.mrf.mxu0
    %v698 = vadd.f32 %v638, %v697
    %v699 = vpop.f32.mrf.mxu0
    %700 = vdwg.mxu0
    %v701 = vrot.slane %v698, 4
    %v702 = vadd.f32 %v698, %v701
    %v703 = vrot.slane %v702, 2
    %v704 = vadd.f32 %v702, %v703
    %v705 = vrot.slane %v704, 1
    %v706 = vadd.f32 %v704, %v705
    %v707 = vmul.f32 %v706, %v509
    %v708 = vsub.f32 %v698, %v707
    %v709 = vmul.f32 %v708, %v708
    %v710 = vrot.slane %v709, 4
    %v711 = vadd.f32 %v709, %v710
    %v712 = vrot.slane %v711, 2
    %v713 = vadd.f32 %v711, %v712
    %v714 = vrot.slane %v713, 1
    %v715 = vadd.f32 %v713, %v714
    %v716 = vmul.f32 %v715, %v509
    %v717 = vadd.f32 %v716, 1e-05
    %v718 = vrsqrt.pop %v717
    %v719 = vmul.f32 %v718, %v717
    %v720 = vmul.f32 %v719, %v718
    %v721 = vmul.f32 0.5, %v720
    %v722 = vsub.f32 1.5, %v721
    %v723 = vmul.f32 %v718, %v722
    %vm724 = vweird.f32 %v717
    %vm725 = vweird.f32 %v718
    %vm726 = vmor %vm724, %vm725
    %v727 = vsel %vm726, %v718, %v723
    %v728 = vmul.f32 %v708, %v727
    %v729 = vmul.f32 %v316, %v728
    %v730 = vadd.f32 %v729, %v329
    %v731 = vmax.f32 %v730, 0.0
    %v732 = vadd.f32 %v535, %v731
    %733 = vst [vmem:[#allocation10] sm:$0xff] %v732
    // Predicated region
    $region34: #{tpu_custom_call.1} parent=1 // pred_check
      _
    $region35: #{tpu_custom_call.1} parent=1 // pred_check_branch
      %735 = sbr.rel (0) target = $region37
    $region36: #{tpu_custom_call.1} parent=1 // pred_region
      %737 = vsyncadd [#allocation4], 0
      %s739 = sshll.u32 [#allocation10], 4
      %s740 = int_to_ptr.vmem [resolvable:$true] %s739
      %s741 = sshll.u32 %s4, 4
      %s742 = int_to_ptr.hbm [resolvable:$true] %s741
      %744 = dma.vmem_to_hbm [thread:$0]  %s740, 128, %s742, [#allocation4]
    $region37: #{tpu_custom_call.1} parent=1 // pred_fallthru
      _
    // Predicated region
    $region38: #{tpu_custom_call.1} parent=1 // pred_check
      _
    $region39: #{tpu_custom_call.1} parent=1 // pred_check_branch
      %746 = sbr.rel (0) target = $region41
    $region40: #{tpu_custom_call.1} parent=1 // pred_region
      %748 = dma.done [#allocation4], 128
    $region41: #{tpu_custom_call.1} parent=1 // pred_fallthru
      _
    %749 = vsyncpa [#allocation3], 1
    %750 = vsyncpa [#allocation6], 1
    %751 = vsyncpa [#allocation9], 1
    %752 = vsyncpa [#allocation4], 1

</llo_original>
